<compile_context>
chip_gen: v7x
topology: tpu7x:2x2x1
jax: 0.10.0
libtpu: 0.0.40
codegen_flags: <defaults>
</compile_context>

<pallas_src>
import jax
import jax.numpy as jnp
from jax import lax
from jax.experimental import pallas as pl
from jax.experimental.pallas import tpu as pltpu


_VMEM_BUDGET_BYTES = 24 * 1024 * 1024   # lane-padded live-buffer budget
_VMEM_LIMIT_BYTES = 32 * 1024 * 1024    # <= v7x 64 MiB physical; fine everywhere


def _round_up(x, m):
    return ((x + m - 1) // m) * m


def _tensorcores_per_chip():
    """Best-effort TensorCores-per-chip (2 on v7x/v4/v3 megacore, else 1)."""
    try:
        kind = jax.devices()[0].device_kind.lower()
    except Exception:
        return 1
    return 2 if any(v in kind for v in ("v7", "v4", "v3")) else 1


def _build_avg_matrix(seq_len, kernel_size):
    """(T, T) f32 matrix W such that moving_mean[t] = sum_s W[t, s] * x[s].

    Encodes replicate padding of (kernel_size-1)//2 steps at both ends plus
    AvgPool1d(kernel_size, stride=1, padding=0): interior entries are 1/K
    inside the window; columns 0 and T-1 absorb the replicated front/end
    samples (their counts are the number of window taps that clip there).
    """
    k = kernel_size
    pad = (k - 1) // 2
    if seq_len == 1:
        return jnp.ones((1, 1), jnp.float32)
    t = jnp.arange(seq_len, dtype=jnp.int32)[:, None]   # output time index
    s = jnp.arange(seq_len, dtype=jnp.int32)[None, :]   # input  time index
    interior = ((s >= t - pad) & (s <= t + pad)).astype(jnp.float32)
    left = jnp.clip(pad - t + 1, 0, k).astype(jnp.float32)              # taps on x[0]
    right = jnp.clip(t + pad - (seq_len - 1) + 1, 0, k).astype(jnp.float32)  # taps on x[T-1]
    counts = jnp.where(s == 0, left, jnp.where(s == seq_len - 1, right, interior))
    return counts * (1.0 / k)


# --------------------------------------------------------------------------
# Kernels
# --------------------------------------------------------------------------

def _decomp_lane_kernel(w_ref, x_ref, res_ref, mean_ref):
    # x_ref: (T, Nb) block of the lane-dense (T, B*C) view — time on sublanes,
    # flattened batch*channel on lanes.  One f32 cast, one MXU matmul, dense
    # (unmasked) output stores whenever Nb is a multiple of 128.
    xf = x_ref[...].astype(jnp.float32)
    mean = jnp.dot(w_ref[...], xf,
                   preferred_element_type=jnp.float32,
                   precision=lax.Precision.HIGHEST)
    mean_ref[...] = mean.astype(mean_ref.dtype)
    res_ref[...] = (xf - mean).astype(res_ref.dtype)


def _decomp_batch_kernel(w_ref, x_ref, res_ref, mean_ref):
    # x_ref: (Bt, T, C) block (channel-dense path, C >= 128).  Small unrolled
    # loop of clean 2-D MXU matmuls per batch row; avoids any in-kernel
    # (T, Bt, C) -> (Bt, T, C) transpose and any padded scratch.
    w = w_ref[...]
    for b in range(x_ref.shape[0]):
        xb = x_ref[b].astype(jnp.float32)                       # (T, C)
        mb = jnp.dot(w, xb, preferred_element_type=jnp.float32,
                     precision=lax.Precision.HIGHEST)
        mean_ref[b] = mb.astype(mean_ref.dtype)
        res_ref[b] = (xb - mb).astype(res_ref.dtype)


# --------------------------------------------------------------------------
# Wrappers
# --------------------------------------------------------------------------

def _decomp_lane_dense(x, w, ncores, lane_block):
    """Small-C path: lane-dense (T, B*C) layout, grid over the lane axis."""
    B, T, C = x.shape
    N = B * C
    t_pad = _round_up(T, 8)
    n_pad = _round_up(N, 128)

    if lane_block is None:
        # Lane-padded footprint per block-sized buffer is t_pad * nb * 4 B.
        # Live block-sized buffers: 2 (input double-buffer) + 2*2 (two outputs
        # double-buffered) + ~3 f32 compiler temporaries; plus W (x2 buffers).
        w_bytes = 2 * T * T * 4
        nb = (_VMEM_BUDGET_BYTES - w_bytes) // (9 * 4 * t_pad)
        nb = max(128, (nb // 128) * 128)
    else:
        nb = max(128, _round_up(lane_block, 128))
    if ncores >= 2 and n_pad >= 2 * 128:
        # Multi-TensorCore chips (v7x): give each core at least one roughly
        # balanced grid step.  Skipped on single-TC v5e/v6e (pure overhead).
        nb = min(nb, max(128, _round_up(pl.cdiv(N, 2), 128)))
    if nb >= N:
        nb = N   # single full block; block dim == array dim is always legal
    grid = (pl.cdiv(N, nb),)

    # Lane-dense view: time on sublanes, batch*channel fills the 128 lanes.
    x2 = jnp.transpose(x, (1, 0, 2)).reshape(T, N)

    spec = pl.BlockSpec((T, nb), lambda i: (0, i))
    w_spec = pl.BlockSpec((T, T), lambda i: (0, 0))   # constant block, fetched once

    res2, mean2 = pl.pallas_call(
        _decomp_lane_kernel,
        out_shape=(jax.ShapeDtypeStruct((T, N), x.dtype),
                   jax.ShapeDtypeStruct((T, N), x.dtype)),
        grid_spec=pltpu.PrefetchScalarGridSpec(
            num_scalar_prefetch=0,
            grid=grid,
            in_specs=[w_spec, spec],
            out_specs=[spec, spec],
        ),
        compiler_params=pltpu.CompilerParams(
            dimension_semantics=("parallel",),
            vmem_limit_bytes=_VMEM_LIMIT_BYTES,
        ),
    )(w, x2)

    res = jnp.transpose(res2.reshape(T, B, C), (1, 0, 2))
    mean = jnp.transpose(mean2.reshape(T, B, C), (1, 0, 2))
    return res, mean


def _decomp_channel_dense(x, w, ncores):
    """Large-C path (C >= 128): keep (B, T, C), grid over batch rows."""
    B, T, C = x.shape
    t_pad = _round_up(T, 8)
    c_pad = _round_up(C, 128)
    per_row = t_pad * c_pad * 4                      # lane-padded f32 row bytes
    w_bytes = 2 * T * T * 4
    # 6 block-sized I/O buffers (input + 2 outputs, double-buffered) of Bt
    # rows each, plus ~3 row-sized f32 temporaries inside the unrolled loop.
    bt = (_VMEM_BUDGET_BYTES - w_bytes - 3 * per_row) // (6 * per_row)
    bt = int(max(1, min(bt, B, 8)))
    if ncores >= 2 and B >= 2:
        bt = min(bt, pl.cdiv(B, 2))                  # keep both v7x cores fed
    grid = (pl.cdiv(B, bt),)

    spec = pl.BlockSpec((bt, T, C), lambda i: (i, 0, 0))
    w_spec = pl.BlockSpec((T, T), lambda i: (0, 0))

    res, mean = pl.pallas_call(
        _decomp_batch_kernel,
        out_shape=(jax.ShapeDtypeStruct((B, T, C), x.dtype),
                   jax.ShapeDtypeStruct((B, T, C), x.dtype)),
        grid_spec=pltpu.PrefetchScalarGridSpec(
            num_scalar_prefetch=0,
            grid=grid,
            in_specs=[w_spec, spec],
            out_specs=[spec, spec],
        ),
        compiler_params=pltpu.CompilerParams(
            dimension_semantics=("parallel",),
            vmem_limit_bytes=_VMEM_LIMIT_BYTES,
        ),
    )(w, x)
    return res, mean


def series_decomp(x, kernel_size, *, lane_block=None):
    """Pallas implementation of SeriesDecomp.forward.

    x: (B, T, C).  Returns (res, moving_mean), both (B, T, C).
    Matches the PyTorch module: replicate the first/last timestep (K-1)//2
    times, then AvgPool1d(kernel_size, stride=1, padding=0) over time.
    `lane_block` optionally overrides the lane-dense block width (testing).
    """
    B, T, C = x.shape
    pad = (kernel_size - 1) // 2
    # The PyTorch module silently changes the sequence length for even K; the
    # D-Linear usage always passes odd K, which we require explicitly.
    assert kernel_size >= 1 and 2 * pad == kernel_size - 1, (
        "SeriesDecomp Pallas kernel requires odd kernel_size so the moving "
        "average preserves the sequence length (as in the D-Linear usage).")

    if T == 1:
        # Degenerate case: every window is K copies of the single timestep.
        return jnp.zeros_like(x), x

    w = _build_avg_matrix(T, kernel_size)
    ncores = _tensorcores_per_chip()

    if C < 128:
        return _decomp_lane_dense(x, w, ncores, lane_block)
    return _decomp_channel_dense(x, w, ncores)


# --------------------------------------------------------------------------
# Reference + self-test
# --------------------------------------------------------------------------

def _series_decomp_ref(x, kernel_size):
    """Pure-JAX reference mirroring the PyTorch module."""
    pad = (kernel_size - 1) // 2
    front = jnp.repeat(x[:, 0:1, :], pad, axis=1)
    end = jnp.repeat(x[:, -1:, :], pad, axis=1)
    xpad = jnp.concatenate([front, x, end], axis=1)
    T = x.shape[1]
    windows = jnp.stack([xpad[:, j:j + T, :] for j in range(kernel_size)], axis=0)
    mean = jnp.mean(windows, axis=0)
    return x - mean, mean


def _check(x, kernel_size, lane_block=None, tol=1e-5):
    res, mean = series_decomp(x, kernel_size, lane_block=lane_block)
    jax.block_until_ready((res, mean))
    assert res.shape == x.shape and mean.shape == x.shape
    assert res.dtype == x.dtype and mean.dtype == x.dtype
    res_ref, mean_ref = _series_decomp_ref(x.astype(jnp.float32), kernel_size)
    assert jnp.allclose(mean.astype(jnp.float32), mean_ref, atol=tol, rtol=tol)
    assert jnp.allclose(res.astype(jnp.float32), res_ref, atol=tol, rtol=tol)
    assert jnp.allclose(res.astype(jnp.float32) + mean.astype(jnp.float32),
                        x.astype(jnp.float32), atol=tol, rtol=tol)


if __name__ == "__main__":
    key = jax.random.PRNGKey(0)
    k1, k2, k3, k4 = jax.random.split(key, 4)

    # 1) D-Linear default regime (kernel_size=25, few channels) -> lane-dense path.
    _check(jax.random.normal(k1, (8, 96, 7), dtype=jnp.float32), kernel_size=25)

    # 2) Channel-dense path (C >= 128) with a multi-step batch grid + ragged tail.
    _check(jax.random.normal(k2, (10, 16, 128), dtype=jnp.float32), kernel_size=5)

    # 3) Lane-dense path with a multi-block lane grid and a ragged tail block.
    _check(jax.random.normal(k3, (5, 24, 64), dtype=jnp.float32), kernel_size=7,
           lane_block=128)

    # 4) bf16 input (cast to f32 once inside the kernel, stored back as bf16).
    _check(jax.random.normal(k4, (4, 32, 8), dtype=jnp.bfloat16), kernel_size=9,
           tol=2e-2)

    print("KERNEL_OK")
</pallas_src>

<mosaic_0001>
module attributes {stable_mosaic.version = 11 : i64} {
  func.func @_decomp_lane_kernel(%arg0: i32, %arg1: memref<96x96xf32, #tpu.memory_space<vmem>>, %arg2: memref<96x56xf32, #tpu.memory_space<vmem>>, %arg3: memref<96x56xf32, #tpu.memory_space<vmem>>, %arg4: memref<96x56xf32, #tpu.memory_space<vmem>>) attributes {dimension_semantics = [#tpu.dimension_semantics<parallel>], iteration_bounds = array<i64: 1>, scalar_prefetch = 0 : i64, scratch_operands = 0 : i64, tpu.core_type = #tpu.core_type<tc>, window_params = [{pipeline_mode = #tpu.pipeline_mode<synchronous>, transform_indices = @transform_0, window_bounds = array<i64: 96, 96>}, {transform_indices = @transform_1, window_bounds = array<i64: 96, 56>}, {transform_indices = @transform_2, window_bounds = array<i64: 96, 56>}, {transform_indices = @transform_3, window_bounds = array<i64: 96, 56>}]} {
    %c0 = arith.constant 0 : index
    %c0_0 = arith.constant 0 : index
    %0 = vector.load %arg2[%c0, %c0_0] : memref<96x56xf32, #tpu.memory_space<vmem>>, vector<96x56xf32>
    %c0_1 = arith.constant 0 : index
    %c0_2 = arith.constant 0 : index
    %1 = vector.load %arg1[%c0_1, %c0_2] : memref<96x96xf32, #tpu.memory_space<vmem>>, vector<96x96xf32>
    %cst = arith.constant dense<0.000000e+00> : vector<96x56xf32>
    %2 = tpu.matmul %1, %0, %cst {dimension_numbers = #tpu.dot_dimension_numbers<[1], [0], [0], [1], [0, 0, 1, 1], [], []>, precision = #tpu.contract_precision<fp32>} : vector<96x96xf32>, vector<96x56xf32>, vector<96x56xf32> -> vector<96x56xf32>
    %c0_3 = arith.constant 0 : index
    %c0_4 = arith.constant 0 : index
    %3 = vector.load %arg4[%c0_3, %c0_4] : memref<96x56xf32, #tpu.memory_space<vmem>>, vector<96x56xf32>
    tpu.vector_store %arg4[%c0_3, %c0_4], %2 {strides = array<i32>} : memref<96x56xf32, #tpu.memory_space<vmem>>, vector<96x56xf32>,
    %4 = arith.subf %0, %2 : vector<96x56xf32>
    %c0_5 = arith.constant 0 : index
    %c0_6 = arith.constant 0 : index
    %5 = vector.load %arg3[%c0_5, %c0_6] : memref<96x56xf32, #tpu.memory_space<vmem>>, vector<96x56xf32>
    tpu.vector_store %arg3[%c0_5, %c0_6], %4 {strides = array<i32>} : memref<96x56xf32, #tpu.memory_space<vmem>>, vector<96x56xf32>,
    return
  }
  func.func @transform_0(%arg0: i32) -> (i32, i32) {
    %c0_i32 = arith.constant 0 : i32
    %c0_i32_0 = arith.constant 0 : i32
    %c0_i32_1 = arith.constant 0 : i32
    return %c0_i32, %c0_i32_0 : i32, i32
  }
  func.func @transform_1(%arg0: i32) -> (i32, i32) {
    %c0_i32 = arith.constant 0 : i32
    %c0_i32_0 = arith.constant 0 : i32
    return %c0_i32, %arg0 : i32, i32
  }
  func.func @transform_2(%arg0: i32) -> (i32, i32) {
    %c0_i32 = arith.constant 0 : i32
    %c0_i32_0 = arith.constant 0 : i32
    return %c0_i32, %arg0 : i32, i32
  }
  func.func @transform_3(%arg0: i32) -> (i32, i32) {
    %c0_i32 = arith.constant 0 : i32
    %c0_i32_0 = arith.constant 0 : i32
    return %c0_i32, %arg0 : i32, i32
  }
}

</mosaic_0001>

<llo_original>
// kernel: tpu_custom_call.1
$region0: #{tpu_custom_call.1}
  #allocation0 [shape = 'u32[]', space=smem, size = 0x4, offset = 0x4, fixed_abs, tag = 'smem constant byte address 0x4 - core index']
  #allocation1 [shape = 'u32[144,128]{1,0:T(1,128)}', space=vmem, size = 0x12000, scoped, tag = 'internal scratch']
  %s0 = inlined_call_operand.vmem [shape: f32[96,96], index: 0, kind: input, shape index: {}]
  %s1 = inlined_call_operand.vmem [shape: f32[96,56], index: 1, kind: input, shape index: {}]
  %s2 = inlined_call_operand.vmem [shape: f32[96,56], index: 2, kind: output, shape index: {0}]
  %s3 = inlined_call_operand.vmem [shape: f32[96,56], index: 3, kind: output, shape index: {1}]
  %4 = xla_tuple %s2, %s3
  %s5 = sld [smem:[#allocation0]]
  $region26: #{tpu_custom_call.1} parent=0
    _
  %s7 = ssub.s32 1, %s5
  %s8 = scalar_select 0, %s7, %s5
  // Predicated region
  $region2: #{tpu_custom_call.1} parent=0 // pred_check
    _
  $region3: #{tpu_custom_call.1} parent=0 // pred_check_branch
    %10 = sbr.rel (0) target = $region5
  $region4: #{tpu_custom_call.1} parent=0 // pred_region
    _
  $region5: #{tpu_custom_call.1} parent=0 // pred_fallthru
    _
  // Predicated region
  $region6: #{tpu_custom_call.1} parent=0 // pred_check
    _
  $region7: #{tpu_custom_call.1} parent=0 // pred_check_branch
    %12 = sbr.rel (0) target = $region9
  $region8: #{tpu_custom_call.1} parent=0 // pred_region
    _
  $region9: #{tpu_custom_call.1} parent=0 // pred_fallthru
    _
  %v13 = vld [vmem:[%s1] sm:$0xff]
  %v14 = vld [vmem:[%s1 + $0x8] sm:$0xff]
  %v15 = vld [vmem:[%s1 + $0x10] sm:$0xff]
  %v16 = vld [vmem:[%s1 + $0x18] sm:$0xff]
  %v17 = vld [vmem:[%s1 + $0x20] sm:$0xff]
  %v18 = vld [vmem:[%s1 + $0x28] sm:$0xff]
  %v19 = vld [vmem:[%s1 + $0x30] sm:$0xff]
  %v20 = vld [vmem:[%s1 + $0x38] sm:$0xff]
  %v21 = vld [vmem:[%s1 + $0x40] sm:$0xff]
  %v22 = vld [vmem:[%s1 + $0x48] sm:$0xff]
  %v23 = vld [vmem:[%s1 + $0x50] sm:$0xff]
  %v24 = vld [vmem:[%s1 + $0x58] sm:$0xff]
  %v25 = vld [vmem:[%s0] sm:$0xff]
  %v26 = vld [vmem:[%s0 + $0x8] sm:$0xff]
  %v27 = vld [vmem:[%s0 + $0x10] sm:$0xff]
  %v28 = vld [vmem:[%s0 + $0x18] sm:$0xff]
  %v29 = vld [vmem:[%s0 + $0x20] sm:$0xff]
  %v30 = vld [vmem:[%s0 + $0x28] sm:$0xff]
  %v31 = vld [vmem:[%s0 + $0x30] sm:$0xff]
  %v32 = vld [vmem:[%s0 + $0x38] sm:$0xff]
  %v33 = vld [vmem:[%s0 + $0x40] sm:$0xff]
  %v34 = vld [vmem:[%s0 + $0x48] sm:$0xff]
  %v35 = vld [vmem:[%s0 + $0x50] sm:$0xff]
  %v36 = vld [vmem:[%s0 + $0x58] sm:$0xff]
  %vm37 = vcmask 785408
  %v39 = vsel %vm37, %v25, 0
  %v42 = vsel %vm37, %v26, 0
  %v45 = vsel %vm37, %v27, 0
  %v48 = vsel %vm37, %v28, 0
  %v51 = vsel %vm37, %v29, 0
  %v54 = vsel %vm37, %v30, 0
  %v57 = vsel %vm37, %v31, 0
  %v60 = vsel %vm37, %v32, 0
  %v63 = vsel %vm37, %v33, 0
  %v66 = vsel %vm37, %v34, 0
  %v69 = vsel %vm37, %v35, 0
  %v72 = vsel %vm37, %v36, 0
  %74 = vmatprep.subr.mxu0 0.0
  %v75 = vand.u32 %v13, 4294901760
  %76 = vmatpush1.msra.mxu0 %v75
  %77 = vmatprep.subr.mxu0 0.0
  %v78 = vand.u32 %v14, 4294901760
  %79 = vmatpush1.msra.mxu0 %v78
  %80 = vmatprep.subr.mxu0 0.0
  %v81 = vand.u32 %v15, 4294901760
  %82 = vmatpush1.msra.mxu0 %v81
  %83 = vmatprep.subr.mxu0 0.0
  %v84 = vand.u32 %v16, 4294901760
  %85 = vmatpush1.msra.mxu0 %v84
  %86 = vmatprep.subr.mxu0 0.0
  %v87 = vand.u32 %v17, 4294901760
  %88 = vmatpush1.msra.mxu0 %v87
  %89 = vmatprep.subr.mxu0 0.0
  %v90 = vand.u32 %v18, 4294901760
  %91 = vmatpush1.msra.mxu0 %v90
  %92 = vmatprep.subr.mxu0 0.0
  %v93 = vand.u32 %v19, 4294901760
  %94 = vmatpush1.msra.mxu0 %v93
  %95 = vmatprep.subr.mxu0 0.0
  %v96 = vand.u32 %v20, 4294901760
  %97 = vmatpush1.msra.mxu0 %v96
  %98 = vmatprep.subr.mxu0 0.0
  %v99 = vand.u32 %v21, 4294901760
  %100 = vmatpush1.msra.mxu0 %v99
  %101 = vmatprep.subr.mxu0 0.0
  %v102 = vand.u32 %v22, 4294901760
  %103 = vmatpush1.msra.mxu0 %v102
  %104 = vmatprep.subr.mxu0 0.0
  %v105 = vand.u32 %v23, 4294901760
  %106 = vmatpush1.msra.mxu0 %v105
  %107 = vmatprep.subr.mxu0 0.0
  %v108 = vand.u32 %v24, 4294901760
  %109 = vmatpush1.msra.mxu0 %v108
  %110 = vmatprep.subr.mxu0 0.0
  %111 = vmatpush1.msra.mxu0 0.0
  %112 = vmatprep.subr.mxu0 0.0
  %113 = vmatpush1.msra.mxu0 0.0
  %114 = vmatprep.subr.mxu0 0.0
  %115 = vmatpush1.msra.mxu0 0.0
  %116 = vmatprep.subr.mxu0 0.0
  %117 = vmatpush1.msra.mxu0 0.0
  %118 = vmatprep.subr.mxu0 0.0
  %119 = vmatpush1.msra.mxu0 0.0
  %120 = vmatprep.subr.mxu0 0.0
  %121 = vmatpush1.msra.mxu0 0.0
  %122 = vmatprep.subr.mxu0 0.0
  %123 = vmatpush1.msra.mxu0 0.0
  %124 = vmatprep.subr.mxu0 0.0
  %125 = vmatpush1.msra.mxu0 0.0
  %126 = vmatprep.subr.mxu0 0.0
  %127 = vmatpush1.msra.mxu0 0.0
  %128 = vmatprep.subr.mxu0 0.0
  %129 = vmatpush1.msra.mxu0 0.0
  %130 = vmatprep.subr.mxu0 0.0
  %131 = vmatpush1.msra.mxu0 0.0
  %132 = vmatprep.subr.mxu0 0.0
  %133 = vmatpush1.msra.mxu0 0.0
  %134 = vmatprep.subr.mxu0 0.0
  %135 = vmatpush1.msra.mxu0 0.0
  %136 = vmatprep.subr.mxu0 0.0
  %137 = vmatpush1.msra.mxu0 0.0
  %138 = vmatprep.subr.mxu0 0.0
  %139 = vmatpush1.msra.mxu0 0.0
  %140 = vmatprep.subr.mxu0 0.0
  %141 = vmatpush1.msra.mxu0 0.0
  %142 = vmatprep.subr.mxu0 0.0
  %143 = vmatpush1.msra.mxu0 0.0
  %144 = vmatprep.subr.mxu0 0.0
  %145 = vmatpush1.msra.mxu0 0.0
  %146 = vmatprep.subr.mxu0 0.0
  %147 = vmatpush1.msra.mxu0 0.0
  %148 = vmatprep.subr.mxu0 0.0
  %149 = vmatpush1.msra.mxu0 0.0
  %150 = vmatprep.mubr.f32.mxu0 0.0
  %v151 = vand.u32 %v39, 4294901760
  %v152 = vsub.f32 %v39, %v151
  %v153 = vand.u32 %v152, 4294901760
  %v154 = vsub.f32 %v152, %v153
  %v155 = vand.u32 %v154, 4294901760
  %156 = vmatmul.mubr.f32.gmra.mrb[0].mxu0 %v155
  %v157 = vpop.f32.mrb[0].mxu0
  %v158 = vadd.f32 0.0, %v157
  %v159 = vpop.f32.mrb[0].mxu0
  %160 = vmatprep.mubr.f32.mxu0 0.0
  %v161 = vand.u32 %v42, 4294901760
  %v162 = vsub.f32 %v42, %v161
  %v163 = vand.u32 %v162, 4294901760
  %v164 = vsub.f32 %v162, %v163
  %v165 = vand.u32 %v164, 4294901760
  %166 = vmatmul.mubr.f32.gmra.mrb[0].mxu0 %v165
  %v167 = vpop.f32.mrb[0].mxu0
  %v168 = vadd.f32 0.0, %v167
  %v169 = vpop.f32.mrb[0].mxu0
  %170 = vmatprep.mubr.f32.mxu0 0.0
  %v171 = vand.u32 %v45, 4294901760
  %v172 = vsub.f32 %v45, %v171
  %v173 = vand.u32 %v172, 4294901760
  %v174 = vsub.f32 %v172, %v173
  %v175 = vand.u32 %v174, 4294901760
  %176 = vmatmul.mubr.f32.gmra.mrb[0].mxu0 %v175
  %v177 = vpop.f32.mrb[0].mxu0
  %v178 = vadd.f32 0.0, %v177
  %v179 = vpop.f32.mrb[0].mxu0
  %180 = vmatprep.mubr.f32.mxu0 0.0
  %v181 = vand.u32 %v48, 4294901760
  %v182 = vsub.f32 %v48, %v181
  %v183 = vand.u32 %v182, 4294901760
  %v184 = vsub.f32 %v182, %v183
  %v185 = vand.u32 %v184, 4294901760
  %186 = vmatmul.mubr.f32.gmra.mrb[0].mxu0 %v185
  %v187 = vpop.f32.mrb[0].mxu0
  %v188 = vadd.f32 0.0, %v187
  %v189 = vpop.f32.mrb[0].mxu0
  %190 = vmatprep.mubr.f32.mxu0 0.0
  %v191 = vand.u32 %v51, 4294901760
  %v192 = vsub.f32 %v51, %v191
  %v193 = vand.u32 %v192, 4294901760
  %v194 = vsub.f32 %v192, %v193
  %v195 = vand.u32 %v194, 4294901760
  %196 = vmatmul.mubr.f32.gmra.mrb[0].mxu0 %v195
  %v197 = vpop.f32.mrb[0].mxu0
  %v198 = vadd.f32 0.0, %v197
  %v199 = vpop.f32.mrb[0].mxu0
  %200 = vmatprep.mubr.f32.mxu0 0.0
  %v201 = vand.u32 %v54, 4294901760
  %v202 = vsub.f32 %v54, %v201
  %v203 = vand.u32 %v202, 4294901760
  %v204 = vsub.f32 %v202, %v203
  %v205 = vand.u32 %v204, 4294901760
  %206 = vmatmul.mubr.f32.gmra.mrb[0].mxu0 %v205
  %v207 = vpop.f32.mrb[0].mxu0
  %v208 = vadd.f32 0.0, %v207
  %v209 = vpop.f32.mrb[0].mxu0
  %210 = vmatprep.mubr.f32.mxu0 0.0
  %v211 = vand.u32 %v57, 4294901760
  %v212 = vsub.f32 %v57, %v211
  %v213 = vand.u32 %v212, 4294901760
  %v214 = vsub.f32 %v212, %v213
  %v215 = vand.u32 %v214, 4294901760
  %216 = vmatmul.mubr.f32.gmra.mrb[0].mxu0 %v215
  %v217 = vpop.f32.mrb[0].mxu0
  %v218 = vadd.f32 0.0, %v217
  %v219 = vpop.f32.mrb[0].mxu0
  %220 = vmatprep.mubr.f32.mxu0 0.0
  %v221 = vand.u32 %v60, 4294901760
  %v222 = vsub.f32 %v60, %v221
  %v223 = vand.u32 %v222, 4294901760
  %v224 = vsub.f32 %v222, %v223
  %v225 = vand.u32 %v224, 4294901760
  %226 = vmatmul.mubr.f32.gmra.mrb[0].mxu0 %v225
  %v227 = vpop.f32.mrb[0].mxu0
  %v228 = vadd.f32 0.0, %v227
  %v229 = vpop.f32.mrb[0].mxu0
  %230 = vmatprep.mubr.f32.mxu0 0.0
  %v231 = vand.u32 %v63, 4294901760
  %v232 = vsub.f32 %v63, %v231
  %v233 = vand.u32 %v232, 4294901760
  %v234 = vsub.f32 %v232, %v233
  %v235 = vand.u32 %v234, 4294901760
  %236 = vmatmul.mubr.f32.gmra.mrb[0].mxu0 %v235
  %v237 = vpop.f32.mrb[0].mxu0
  %v238 = vadd.f32 0.0, %v237
  %v239 = vpop.f32.mrb[0].mxu0
  %240 = vmatprep.mubr.f32.mxu0 0.0
  %v241 = vand.u32 %v66, 4294901760
  %v242 = vsub.f32 %v66, %v241
  %v243 = vand.u32 %v242, 4294901760
  %v244 = vsub.f32 %v242, %v243
  %v245 = vand.u32 %v244, 4294901760
  %246 = vmatmul.mubr.f32.gmra.mrb[0].mxu0 %v245
  %v247 = vpop.f32.mrb[0].mxu0
  %v248 = vadd.f32 0.0, %v247
  %v249 = vpop.f32.mrb[0].mxu0
  %250 = vmatprep.mubr.f32.mxu0 0.0
  %v251 = vand.u32 %v69, 4294901760
  %v252 = vsub.f32 %v69, %v251
  %v253 = vand.u32 %v252, 4294901760
  %v254 = vsub.f32 %v252, %v253
  %v255 = vand.u32 %v254, 4294901760
  %256 = vmatmul.mubr.f32.gmra.mrb[0].mxu0 %v255
  %v257 = vpop.f32.mrb[0].mxu0
  %v258 = vadd.f32 0.0, %v257
  %v259 = vpop.f32.mrb[0].mxu0
  %260 = vmatprep.mubr.f32.mxu0 0.0
  %v261 = vand.u32 %v72, 4294901760
  %v262 = vsub.f32 %v72, %v261
  %v263 = vand.u32 %v262, 4294901760
  %v264 = vsub.f32 %v262, %v263
  %v265 = vand.u32 %v264, 4294901760
  %266 = vmatmul.mubr.f32.gmra.mrb[0].mxu0 %v265
  %v267 = vpop.f32.mrb[0].mxu0
  %v268 = vadd.f32 0.0, %v267
  %v269 = vpop.f32.mrb[0].mxu0
  %270 = vdwg.mxu0
  %271 = vmatprep.subr.mxu0 0.0
  %v272 = vand.u32 %v13, 4294901760
  %v273 = vsub.f32 %v13, %v272
  %v274 = vand.u32 %v273, 4294901760
  %v275 = vsub.f32 %v273, %v274
  %v276 = vand.u32 %v275, 4294901760
  %277 = vmatpush1.msra.mxu0 %v276
  %278 = vmatprep.subr.mxu0 0.0
  %v279 = vand.u32 %v14, 4294901760
  %v280 = vsub.f32 %v14, %v279
  %v281 = vand.u32 %v280, 4294901760
  %v282 = vsub.f32 %v280, %v281
  %v283 = vand.u32 %v282, 4294901760
  %284 = vmatpush1.msra.mxu0 %v283
  %285 = vmatprep.subr.mxu0 0.0
  %v286 = vand.u32 %v15, 4294901760
  %v287 = vsub.f32 %v15, %v286
  %v288 = vand.u32 %v287, 4294901760
  %v289 = vsub.f32 %v287, %v288
  %v290 = vand.u32 %v289, 4294901760
  %291 = vmatpush1.msra.mxu0 %v290
  %292 = vmatprep.subr.mxu0 0.0
  %v293 = vand.u32 %v16, 4294901760
  %v294 = vsub.f32 %v16, %v293
  %v295 = vand.u32 %v294, 4294901760
  %v296 = vsub.f32 %v294, %v295
  %v297 = vand.u32 %v296, 4294901760
  %298 = vmatpush1.msra.mxu0 %v297
  %299 = vmatprep.subr.mxu0 0.0
  %v300 = vand.u32 %v17, 4294901760
  %v301 = vsub.f32 %v17, %v300
  %v302 = vand.u32 %v301, 4294901760
  %v303 = vsub.f32 %v301, %v302
  %v304 = vand.u32 %v303, 4294901760
  %305 = vmatpush1.msra.mxu0 %v304
  %306 = vmatprep.subr.mxu0 0.0
  %v307 = vand.u32 %v18, 4294901760
  %v308 = vsub.f32 %v18, %v307
  %v309 = vand.u32 %v308, 4294901760
  %v310 = vsub.f32 %v308, %v309
  %v311 = vand.u32 %v310, 4294901760
  %312 = vmatpush1.msra.mxu0 %v311
  %313 = vmatprep.subr.mxu0 0.0
  %v314 = vand.u32 %v19, 4294901760
  %v315 = vsub.f32 %v19, %v314
  %v316 = vand.u32 %v315, 4294901760
  %v317 = vsub.f32 %v315, %v316
  %v318 = vand.u32 %v317, 4294901760
  %319 = vmatpush1.msra.mxu0 %v318
  %320 = vmatprep.subr.mxu0 0.0
  %v321 = vand.u32 %v20, 4294901760
  %v322 = vsub.f32 %v20, %v321
  %v323 = vand.u32 %v322, 4294901760
  %v324 = vsub.f32 %v322, %v323
  %v325 = vand.u32 %v324, 4294901760
  %326 = vmatpush1.msra.mxu0 %v325
  %327 = vmatprep.subr.mxu0 0.0
  %v328 = vand.u32 %v21, 4294901760
  %v329 = vsub.f32 %v21, %v328
  %v330 = vand.u32 %v329, 4294901760
  %v331 = vsub.f32 %v329, %v330
  %v332 = vand.u32 %v331, 4294901760
  %333 = vmatpush1.msra.mxu0 %v332
  %334 = vmatprep.subr.mxu0 0.0
  %v335 = vand.u32 %v22, 4294901760
  %v336 = vsub.f32 %v22, %v335
  %v337 = vand.u32 %v336, 4294901760
  %v338 = vsub.f32 %v336, %v337
  %v339 = vand.u32 %v338, 4294901760
  %340 = vmatpush1.msra.mxu0 %v339
  %341 = vmatprep.subr.mxu0 0.0
  %v342 = vand.u32 %v23, 4294901760
  %v343 = vsub.f32 %v23, %v342
  %v344 = vand.u32 %v343, 4294901760
  %v345 = vsub.f32 %v343, %v344
  %v346 = vand.u32 %v345, 4294901760
  %347 = vmatpush1.msra.mxu0 %v346
  %348 = vmatprep.subr.mxu0 0.0
  %v349 = vand.u32 %v24, 4294901760
  %v350 = vsub.f32 %v24, %v349
  %v351 = vand.u32 %v350, 4294901760
  %v352 = vsub.f32 %v350, %v351
  %v353 = vand.u32 %v352, 4294901760
  %354 = vmatpush1.msra.mxu0 %v353
  %355 = vmatprep.subr.mxu0 0.0
  %356 = vmatpush1.msra.mxu0 0.0
  %357 = vmatprep.subr.mxu0 0.0
  %358 = vmatpush1.msra.mxu0 0.0
  %359 = vmatprep.subr.mxu0 0.0
  %360 = vmatpush1.msra.mxu0 0.0
  %361 = vmatprep.subr.mxu0 0.0
  %362 = vmatpush1.msra.mxu0 0.0
  %363 = vmatprep.subr.mxu0 0.0
  %364 = vmatpush1.msra.mxu0 0.0
  %365 = vmatprep.subr.mxu0 0.0
  %366 = vmatpush1.msra.mxu0 0.0
  %367 = vmatprep.subr.mxu0 0.0
  %368 = vmatpush1.msra.mxu0 0.0
  %369 = vmatprep.subr.mxu0 0.0
  %370 = vmatpush1.msra.mxu0 0.0
  %371 = vmatprep.subr.mxu0 0.0
  %372 = vmatpush1.msra.mxu0 0.0
  %373 = vmatprep.subr.mxu0 0.0
  %374 = vmatpush1.msra.mxu0 0.0
  %375 = vmatprep.subr.mxu0 0.0
  %376 = vmatpush1.msra.mxu0 0.0
  %377 = vmatprep.subr.mxu0 0.0
  %378 = vmatpush1.msra.mxu0 0.0
  %379 = vmatprep.subr.mxu0 0.0
  %380 = vmatpush1.msra.mxu0 0.0
  %381 = vmatprep.subr.mxu0 0.0
  %382 = vmatpush1.msra.mxu0 0.0
  %383 = vmatprep.subr.mxu0 0.0
  %384 = vmatpush1.msra.mxu0 0.0
  %385 = vmatprep.subr.mxu0 0.0
  %386 = vmatpush1.msra.mxu0 0.0
  %387 = vmatprep.subr.mxu0 0.0
  %388 = vmatpush1.msra.mxu0 0.0
  %389 = vmatprep.subr.mxu0 0.0
  %390 = vmatpush1.msra.mxu0 0.0
  %391 = vmatprep.subr.mxu0 0.0
  %392 = vmatpush1.msra.mxu0 0.0
  %393 = vmatprep.subr.mxu0 0.0
  %394 = vmatpush1.msra.mxu0 0.0
  %395 = vmatprep.mubr.f32.mxu0 0.0
  %v396 = vand.u32 %v39, 4294901760
  %397 = vmatmul.mubr.f32.gmra.mrb[0].mxu0 %v396
  %v398 = vpop.f32.mrb[0].mxu0
  %v399 = vadd.f32 %v158, %v398
  %v400 = vpop.f32.mrb[0].mxu0
  %401 = vmatprep.mubr.f32.mxu0 0.0
  %v402 = vand.u32 %v42, 4294901760
  %403 = vmatmul.mubr.f32.gmra.mrb[0].mxu0 %v402
  %v404 = vpop.f32.mrb[0].mxu0
  %v405 = vadd.f32 %v168, %v404
  %v406 = vpop.f32.mrb[0].mxu0
  %407 = vmatprep.mubr.f32.mxu0 0.0
  %v408 = vand.u32 %v45, 4294901760
  %409 = vmatmul.mubr.f32.gmra.mrb[0].mxu0 %v408
  %v410 = vpop.f32.mrb[0].mxu0
  %v411 = vadd.f32 %v178, %v410
  %v412 = vpop.f32.mrb[0].mxu0
  %413 = vmatprep.mubr.f32.mxu0 0.0
  %v414 = vand.u32 %v48, 4294901760
  %415 = vmatmul.mubr.f32.gmra.mrb[0].mxu0 %v414
  %v416 = vpop.f32.mrb[0].mxu0
  %v417 = vadd.f32 %v188, %v416
  %v418 = vpop.f32.mrb[0].mxu0
  %419 = vmatprep.mubr.f32.mxu0 0.0
  %v420 = vand.u32 %v51, 4294901760
  %421 = vmatmul.mubr.f32.gmra.mrb[0].mxu0 %v420
  %v422 = vpop.f32.mrb[0].mxu0
  %v423 = vadd.f32 %v198, %v422
  %v424 = vpop.f32.mrb[0].mxu0
  %425 = vmatprep.mubr.f32.mxu0 0.0
  %v426 = vand.u32 %v54, 4294901760
  %427 = vmatmul.mubr.f32.gmra.mrb[0].mxu0 %v426
  %v428 = vpop.f32.mrb[0].mxu0
  %v429 = vadd.f32 %v208, %v428
  %v430 = vpop.f32.mrb[0].mxu0
  %431 = vmatprep.mubr.f32.mxu0 0.0
  %v432 = vand.u32 %v57, 4294901760
  %433 = vmatmul.mubr.f32.gmra.mrb[0].mxu0 %v432
  %v434 = vpop.f32.mrb[0].mxu0
  %v435 = vadd.f32 %v218, %v434
  %v436 = vpop.f32.mrb[0].mxu0
  %437 = vmatprep.mubr.f32.mxu0 0.0
  %v438 = vand.u32 %v60, 4294901760
  %439 = vmatmul.mubr.f32.gmra.mrb[0].mxu0 %v438
  %v440 = vpop.f32.mrb[0].mxu0
  %v441 = vadd.f32 %v228, %v440
  %v442 = vpop.f32.mrb[0].mxu0
  %443 = vmatprep.mubr.f32.mxu0 0.0
  %v444 = vand.u32 %v63, 4294901760
  %445 = vmatmul.mubr.f32.gmra.mrb[0].mxu0 %v444
  %v446 = vpop.f32.mrb[0].mxu0
  %v447 = vadd.f32 %v238, %v446
  %v448 = vpop.f32.mrb[0].mxu0
  %449 = vmatprep.mubr.f32.mxu0 0.0
  %v450 = vand.u32 %v66, 4294901760
  %451 = vmatmul.mubr.f32.gmra.mrb[0].mxu0 %v450
  %v452 = vpop.f32.mrb[0].mxu0
  %v453 = vadd.f32 %v248, %v452
  %v454 = vpop.f32.mrb[0].mxu0
  %455 = vmatprep.mubr.f32.mxu0 0.0
  %v456 = vand.u32 %v69, 4294901760
  %457 = vmatmul.mubr.f32.gmra.mrb[0].mxu0 %v456
  %v458 = vpop.f32.mrb[0].mxu0
  %v459 = vadd.f32 %v258, %v458
  %v460 = vpop.f32.mrb[0].mxu0
  %461 = vmatprep.mubr.f32.mxu0 0.0
  %v462 = vand.u32 %v72, 4294901760
  %463 = vmatmul.mubr.f32.gmra.mrb[0].mxu0 %v462
  %v464 = vpop.f32.mrb[0].mxu0
  %v465 = vadd.f32 %v268, %v464
  %v466 = vpop.f32.mrb[0].mxu0
  %467 = vdwg.mxu0
  %468 = vmatprep.subr.mxu0 0.0
  %v469 = vand.u32 %v13, 4294901760
  %v470 = vsub.f32 %v13, %v469
  %471 = vmatpush1.msra.mxu0 %v470
  %472 = vmatprep.subr.mxu0 0.0
  %v473 = vand.u32 %v14, 4294901760
  %v474 = vsub.f32 %v14, %v473
  %475 = vmatpush1.msra.mxu0 %v474
  %476 = vmatprep.subr.mxu0 0.0
  %v477 = vand.u32 %v15, 4294901760
  %v478 = vsub.f32 %v15, %v477
  %479 = vmatpush1.msra.mxu0 %v478
  %480 = vmatprep.subr.mxu0 0.0
  %v481 = vand.u32 %v16, 4294901760
  %v482 = vsub.f32 %v16, %v481
  %483 = vmatpush1.msra.mxu0 %v482
  %484 = vmatprep.subr.mxu0 0.0
  %v485 = vand.u32 %v17, 4294901760
  %v486 = vsub.f32 %v17, %v485
  %487 = vmatpush1.msra.mxu0 %v486
  %488 = vmatprep.subr.mxu0 0.0
  %v489 = vand.u32 %v18, 4294901760
  %v490 = vsub.f32 %v18, %v489
  %491 = vmatpush1.msra.mxu0 %v490
  %492 = vmatprep.subr.mxu0 0.0
  %v493 = vand.u32 %v19, 4294901760
  %v494 = vsub.f32 %v19, %v493
  %495 = vmatpush1.msra.mxu0 %v494
  %496 = vmatprep.subr.mxu0 0.0
  %v497 = vand.u32 %v20, 4294901760
  %v498 = vsub.f32 %v20, %v497
  %499 = vmatpush1.msra.mxu0 %v498
  %500 = vmatprep.subr.mxu0 0.0
  %v501 = vand.u32 %v21, 4294901760
  %v502 = vsub.f32 %v21, %v501
  %503 = vmatpush1.msra.mxu0 %v502
  %504 = vmatprep.subr.mxu0 0.0
  %v505 = vand.u32 %v22, 4294901760
  %v506 = vsub.f32 %v22, %v505
  %507 = vmatpush1.msra.mxu0 %v506
  %508 = vmatprep.subr.mxu0 0.0
  %v509 = vand.u32 %v23, 4294901760
  %v510 = vsub.f32 %v23, %v509
  %511 = vmatpush1.msra.mxu0 %v510
  %512 = vmatprep.subr.mxu0 0.0
  %v513 = vand.u32 %v24, 4294901760
  %v514 = vsub.f32 %v24, %v513
  %515 = vmatpush1.msra.mxu0 %v514
  %516 = vmatprep.subr.mxu0 0.0
  %517 = vmatpush1.msra.mxu0 0.0
  %518 = vmatprep.subr.mxu0 0.0
  %519 = vmatpush1.msra.mxu0 0.0
  %520 = vmatprep.subr.mxu0 0.0
  %521 = vmatpush1.msra.mxu0 0.0
  %522 = vmatprep.subr.mxu0 0.0
  %523 = vmatpush1.msra.mxu0 0.0
  %524 = vmatprep.subr.mxu0 0.0
  %525 = vmatpush1.msra.mxu0 0.0
  %526 = vmatprep.subr.mxu0 0.0
  %527 = vmatpush1.msra.mxu0 0.0
  %528 = vmatprep.subr.mxu0 0.0
  %529 = vmatpush1.msra.mxu0 0.0
  %530 = vmatprep.subr.mxu0 0.0
  %531 = vmatpush1.msra.mxu0 0.0
  %532 = vmatprep.subr.mxu0 0.0
  %533 = vmatpush1.msra.mxu0 0.0
  %534 = vmatprep.subr.mxu0 0.0
  %535 = vmatpush1.msra.mxu0 0.0
  %536 = vmatprep.subr.mxu0 0.0
  %537 = vmatpush1.msra.mxu0 0.0
  %538 = vmatprep.subr.mxu0 0.0
  %539 = vmatpush1.msra.mxu0 0.0
  %540 = vmatprep.subr.mxu0 0.0
  %541 = vmatpush1.msra.mxu0 0.0
  %542 = vmatprep.subr.mxu0 0.0
  %543 = vmatpush1.msra.mxu0 0.0
  %544 = vmatprep.subr.mxu0 0.0
  %545 = vmatpush1.msra.mxu0 0.0
  %546 = vmatprep.subr.mxu0 0.0
  %547 = vmatpush1.msra.mxu0 0.0
  %548 = vmatprep.subr.mxu0 0.0
  %549 = vmatpush1.msra.mxu0 0.0
  %550 = vmatprep.subr.mxu0 0.0
  %551 = vmatpush1.msra.mxu0 0.0
  %552 = vmatprep.subr.mxu0 0.0
  %553 = vmatpush1.msra.mxu0 0.0
  %554 = vmatprep.subr.mxu0 0.0
  %555 = vmatpush1.msra.mxu0 0.0
  %556 = vmatprep.mubr.f32.mxu0 0.0
  %v557 = vand.u32 %v39, 4294901760
  %v558 = vsub.f32 %v39, %v557
  %559 = vmatmul.mubr.f32.gmra.mrb[0].mxu0 %v558
  %v560 = vpop.f32.mrb[0].mxu0
  %v561 = vadd.f32 %v399, %v560
  %v562 = vpop.f32.mrb[0].mxu0
  %563 = vmatprep.mubr.f32.mxu0 0.0
  %v564 = vand.u32 %v42, 4294901760
  %v565 = vsub.f32 %v42, %v564
  %566 = vmatmul.mubr.f32.gmra.mrb[0].mxu0 %v565
  %v567 = vpop.f32.mrb[0].mxu0
  %v568 = vadd.f32 %v405, %v567
  %v569 = vpop.f32.mrb[0].mxu0
  %570 = vmatprep.mubr.f32.mxu0 0.0
  %v571 = vand.u32 %v45, 4294901760
  %v572 = vsub.f32 %v45, %v571
  %573 = vmatmul.mubr.f32.gmra.mrb[0].mxu0 %v572
  %v574 = vpop.f32.mrb[0].mxu0
  %v575 = vadd.f32 %v411, %v574
  %v576 = vpop.f32.mrb[0].mxu0
  %577 = vmatprep.mubr.f32.mxu0 0.0
  %v578 = vand.u32 %v48, 4294901760
  %v579 = vsub.f32 %v48, %v578
  %580 = vmatmul.mubr.f32.gmra.mrb[0].mxu0 %v579
  %v581 = vpop.f32.mrb[0].mxu0
  %v582 = vadd.f32 %v417, %v581
  %v583 = vpop.f32.mrb[0].mxu0
  %584 = vmatprep.mubr.f32.mxu0 0.0
  %v585 = vand.u32 %v51, 4294901760
  %v586 = vsub.f32 %v51, %v585
  %587 = vmatmul.mubr.f32.gmra.mrb[0].mxu0 %v586
  %v588 = vpop.f32.mrb[0].mxu0
  %v589 = vadd.f32 %v423, %v588
  %v590 = vpop.f32.mrb[0].mxu0
  %591 = vmatprep.mubr.f32.mxu0 0.0
  %v592 = vand.u32 %v54, 4294901760
  %v593 = vsub.f32 %v54, %v592
  %594 = vmatmul.mubr.f32.gmra.mrb[0].mxu0 %v593
  %v595 = vpop.f32.mrb[0].mxu0
  %v596 = vadd.f32 %v429, %v595
  %v597 = vpop.f32.mrb[0].mxu0
  %598 = vmatprep.mubr.f32.mxu0 0.0
  %v599 = vand.u32 %v57, 4294901760
  %v600 = vsub.f32 %v57, %v599
  %601 = vmatmul.mubr.f32.gmra.mrb[0].mxu0 %v600
  %v602 = vpop.f32.mrb[0].mxu0
  %v603 = vadd.f32 %v435, %v602
  %v604 = vpop.f32.mrb[0].mxu0
  %605 = vmatprep.mubr.f32.mxu0 0.0
  %v606 = vand.u32 %v60, 4294901760
  %v607 = vsub.f32 %v60, %v606
  %608 = vmatmul.mubr.f32.gmra.mrb[0].mxu0 %v607
  %v609 = vpop.f32.mrb[0].mxu0
  %v610 = vadd.f32 %v441, %v609
  %v611 = vpop.f32.mrb[0].mxu0
  %612 = vmatprep.mubr.f32.mxu0 0.0
  %v613 = vand.u32 %v63, 4294901760
  %v614 = vsub.f32 %v63, %v613
  %615 = vmatmul.mubr.f32.gmra.mrb[0].mxu0 %v614
  %v616 = vpop.f32.mrb[0].mxu0
  %v617 = vadd.f32 %v447, %v616
  %v618 = vpop.f32.mrb[0].mxu0
  %619 = vmatprep.mubr.f32.mxu0 0.0
  %v620 = vand.u32 %v66, 4294901760
  %v621 = vsub.f32 %v66, %v620
  %622 = vmatmul.mubr.f32.gmra.mrb[0].mxu0 %v621
  %v623 = vpop.f32.mrb[0].mxu0
  %v624 = vadd.f32 %v453, %v623
  %v625 = vpop.f32.mrb[0].mxu0
  %626 = vmatprep.mubr.f32.mxu0 0.0
  %v627 = vand.u32 %v69, 4294901760
  %v628 = vsub.f32 %v69, %v627
  %629 = vmatmul.mubr.f32.gmra.mrb[0].mxu0 %v628
  %v630 = vpop.f32.mrb[0].mxu0
  %v631 = vadd.f32 %v459, %v630
  %v632 = vpop.f32.mrb[0].mxu0
  %633 = vmatprep.mubr.f32.mxu0 0.0
  %v634 = vand.u32 %v72, 4294901760
  %v635 = vsub.f32 %v72, %v634
  %636 = vmatmul.mubr.f32.gmra.mrb[0].mxu0 %v635
  %v637 = vpop.f32.mrb[0].mxu0
  %v638 = vadd.f32 %v465, %v637
  %v639 = vpop.f32.mrb[0].mxu0
  %640 = vdwg.mxu0
  %641 = vmatprep.subr.mxu0 0.0
  %v642 = vand.u32 %v13, 4294901760
  %643 = vmatpush1.msra.mxu0 %v642
  %644 = vmatprep.subr.mxu0 0.0
  %v645 = vand.u32 %v14, 4294901760
  %646 = vmatpush1.msra.mxu0 %v645
  %647 = vmatprep.subr.mxu0 0.0
  %v648 = vand.u32 %v15, 4294901760
  %649 = vmatpush1.msra.mxu0 %v648
  %650 = vmatprep.subr.mxu0 0.0
  %v651 = vand.u32 %v16, 4294901760
  %652 = vmatpush1.msra.mxu0 %v651
  %653 = vmatprep.subr.mxu0 0.0
  %v654 = vand.u32 %v17, 4294901760
  %655 = vmatpush1.msra.mxu0 %v654
  %656 = vmatprep.subr.mxu0 0.0
  %v657 = vand.u32 %v18, 4294901760
  %658 = vmatpush1.msra.mxu0 %v657
  %659 = vmatprep.subr.mxu0 0.0
  %v660 = vand.u32 %v19, 4294901760
  %661 = vmatpush1.msra.mxu0 %v660
  %662 = vmatprep.subr.mxu0 0.0
  %v663 = vand.u32 %v20, 4294901760
  %664 = vmatpush1.msra.mxu0 %v663
  %665 = vmatprep.subr.mxu0 0.0
  %v666 = vand.u32 %v21, 4294901760
  %667 = vmatpush1.msra.mxu0 %v666
  %668 = vmatprep.subr.mxu0 0.0
  %v669 = vand.u32 %v22, 4294901760
  %670 = vmatpush1.msra.mxu0 %v669
  %671 = vmatprep.subr.mxu0 0.0
  %v672 = vand.u32 %v23, 4294901760
  %673 = vmatpush1.msra.mxu0 %v672
  %674 = vmatprep.subr.mxu0 0.0
  %v675 = vand.u32 %v24, 4294901760
  %676 = vmatpush1.msra.mxu0 %v675
  %677 = vmatprep.subr.mxu0 0.0
  %678 = vmatpush1.msra.mxu0 0.0
  %679 = vmatprep.subr.mxu0 0.0
  %680 = vmatpush1.msra.mxu0 0.0
  %681 = vmatprep.subr.mxu0 0.0
  %682 = vmatpush1.msra.mxu0 0.0
  %683 = vmatprep.subr.mxu0 0.0
  %684 = vmatpush1.msra.mxu0 0.0
  %685 = vmatprep.subr.mxu0 0.0
  %686 = vmatpush1.msra.mxu0 0.0
  %687 = vmatprep.subr.mxu0 0.0
  %688 = vmatpush1.msra.mxu0 0.0
  %689 = vmatprep.subr.mxu0 0.0
  %690 = vmatpush1.msra.mxu0 0.0
  %691 = vmatprep.subr.mxu0 0.0
  %692 = vmatpush1.msra.mxu0 0.0
  %693 = vmatprep.subr.mxu0 0.0
  %694 = vmatpush1.msra.mxu0 0.0
  %695 = vmatprep.subr.mxu0 0.0
  %696 = vmatpush1.msra.mxu0 0.0
  %697 = vmatprep.subr.mxu0 0.0
  %698 = vmatpush1.msra.mxu0 0.0
  %699 = vmatprep.subr.mxu0 0.0
  %700 = vmatpush1.msra.mxu0 0.0
  %701 = vmatprep.subr.mxu0 0.0
  %702 = vmatpush1.msra.mxu0 0.0
  %703 = vmatprep.subr.mxu0 0.0
  %704 = vmatpush1.msra.mxu0 0.0
  %705 = vmatprep.subr.mxu0 0.0
  %706 = vmatpush1.msra.mxu0 0.0
  %707 = vmatprep.subr.mxu0 0.0
  %708 = vmatpush1.msra.mxu0 0.0
  %709 = vmatprep.subr.mxu0 0.0
  %710 = vmatpush1.msra.mxu0 0.0
  %711 = vmatprep.subr.mxu0 0.0
  %712 = vmatpush1.msra.mxu0 0.0
  %713 = vmatprep.subr.mxu0 0.0
  %714 = vmatpush1.msra.mxu0 0.0
  %715 = vmatprep.subr.mxu0 0.0
  %716 = vmatpush1.msra.mxu0 0.0
  %717 = vmatprep.mubr.f32.mxu0 0.0
  %v718 = vand.u32 %v39, 4294901760
  %v719 = vsub.f32 %v39, %v718
  %v720 = vand.u32 %v719, 4294901760
  %721 = vmatmul.mubr.f32.gmra.mrb[0].mxu0 %v720
  %v722 = vpop.f32.mrb[0].mxu0
  %v723 = vadd.f32 %v561, %v722
  %v724 = vpop.f32.mrb[0].mxu0
  %725 = vmatprep.mubr.f32.mxu0 0.0
  %v726 = vand.u32 %v42, 4294901760
  %v727 = vsub.f32 %v42, %v726
  %v728 = vand.u32 %v727, 4294901760
  %729 = vmatmul.mubr.f32.gmra.mrb[0].mxu0 %v728
  %v730 = vpop.f32.mrb[0].mxu0
  %v731 = vadd.f32 %v568, %v730
  %v732 = vpop.f32.mrb[0].mxu0
  %733 = vmatprep.mubr.f32.mxu0 0.0
  %v734 = vand.u32 %v45, 4294901760
  %v735 = vsub.f32 %v45, %v734
  %v736 = vand.u32 %v735, 4294901760
  %737 = vmatmul.mubr.f32.gmra.mrb[0].mxu0 %v736
  %v738 = vpop.f32.mrb[0].mxu0
  %v739 = vadd.f32 %v575, %v738
  %v740 = vpop.f32.mrb[0].mxu0
  %741 = vmatprep.mubr.f32.mxu0 0.0
  %v742 = vand.u32 %v48, 4294901760
  %v743 = vsub.f32 %v48, %v742
  %v744 = vand.u32 %v743, 4294901760
  %745 = vmatmul.mubr.f32.gmra.mrb[0].mxu0 %v744
  %v746 = vpop.f32.mrb[0].mxu0
  %v747 = vadd.f32 %v582, %v746
  %v748 = vpop.f32.mrb[0].mxu0
  %749 = vmatprep.mubr.f32.mxu0 0.0
  %v750 = vand.u32 %v51, 4294901760
  %v751 = vsub.f32 %v51, %v750
  %v752 = vand.u32 %v751, 4294901760
  %753 = vmatmul.mubr.f32.gmra.mrb[0].mxu0 %v752
  %v754 = vpop.f32.mrb[0].mxu0
  %v755 = vadd.f32 %v589, %v754
  %v756 = vpop.f32.mrb[0].mxu0
  %757 = vmatprep.mubr.f32.mxu0 0.0
  %v758 = vand.u32 %v54, 4294901760
  %v759 = vsub.f32 %v54, %v758
  %v760 = vand.u32 %v759, 4294901760
  %761 = vmatmul.mubr.f32.gmra.mrb[0].mxu0 %v760
  %v762 = vpop.f32.mrb[0].mxu0
  %v763 = vadd.f32 %v596, %v762
  %v764 = vpop.f32.mrb[0].mxu0
  %765 = vmatprep.mubr.f32.mxu0 0.0
  %v766 = vand.u32 %v57, 4294901760
  %v767 = vsub.f32 %v57, %v766
  %v768 = vand.u32 %v767, 4294901760
  %769 = vmatmul.mubr.f32.gmra.mrb[0].mxu0 %v768
  %v770 = vpop.f32.mrb[0].mxu0
  %v771 = vadd.f32 %v603, %v770
  %v772 = vpop.f32.mrb[0].mxu0
  %773 = vmatprep.mubr.f32.mxu0 0.0
  %v774 = vand.u32 %v60, 4294901760
  %v775 = vsub.f32 %v60, %v774
  %v776 = vand.u32 %v775, 4294901760
  %777 = vmatmul.mubr.f32.gmra.mrb[0].mxu0 %v776
  %v778 = vpop.f32.mrb[0].mxu0
  %v779 = vadd.f32 %v610, %v778
  %v780 = vpop.f32.mrb[0].mxu0
  %781 = vmatprep.mubr.f32.mxu0 0.0
  %v782 = vand.u32 %v63, 4294901760
  %v783 = vsub.f32 %v63, %v782
  %v784 = vand.u32 %v783, 4294901760
  %785 = vmatmul.mubr.f32.gmra.mrb[0].mxu0 %v784
  %v786 = vpop.f32.mrb[0].mxu0
  %v787 = vadd.f32 %v617, %v786
  %v788 = vpop.f32.mrb[0].mxu0
  %789 = vmatprep.mubr.f32.mxu0 0.0
  %v790 = vand.u32 %v66, 4294901760
  %v791 = vsub.f32 %v66, %v790
  %v792 = vand.u32 %v791, 4294901760
  %793 = vmatmul.mubr.f32.gmra.mrb[0].mxu0 %v792
  %v794 = vpop.f32.mrb[0].mxu0
  %v795 = vadd.f32 %v624, %v794
  %v796 = vpop.f32.mrb[0].mxu0
  %797 = vmatprep.mubr.f32.mxu0 0.0
  %v798 = vand.u32 %v69, 4294901760
  %v799 = vsub.f32 %v69, %v798
  %v800 = vand.u32 %v799, 4294901760
  %801 = vmatmul.mubr.f32.gmra.mrb[0].mxu0 %v800
  %v802 = vpop.f32.mrb[0].mxu0
  %v803 = vadd.f32 %v631, %v802
  %v804 = vpop.f32.mrb[0].mxu0
  %805 = vmatprep.mubr.f32.mxu0 0.0
  %v806 = vand.u32 %v72, 4294901760
  %v807 = vsub.f32 %v72, %v806
  %v808 = vand.u32 %v807, 4294901760
  %809 = vmatmul.mubr.f32.gmra.mrb[0].mxu0 %v808
  %v810 = vpop.f32.mrb[0].mxu0
  %v811 = vadd.f32 %v638, %v810
  %v812 = vpop.f32.mrb[0].mxu0
  %813 = vdwg.mxu0
  %814 = vmatprep.subr.mxu0 0.0
  %v815 = vand.u32 %v13, 4294901760
  %v816 = vsub.f32 %v13, %v815
  %v817 = vand.u32 %v816, 4294901760
  %818 = vmatpush1.msra.mxu0 %v817
  %819 = vmatprep.subr.mxu0 0.0
  %v820 = vand.u32 %v14, 4294901760
  %v821 = vsub.f32 %v14, %v820
  %v822 = vand.u32 %v821, 4294901760
  %823 = vmatpush1.msra.mxu0 %v822
  %824 = vmatprep.subr.mxu0 0.0
  %v825 = vand.u32 %v15, 4294901760
  %v826 = vsub.f32 %v15, %v825
  %v827 = vand.u32 %v826, 4294901760
  %828 = vmatpush1.msra.mxu0 %v827
  %829 = vmatprep.subr.mxu0 0.0
  %v830 = vand.u32 %v16, 4294901760
  %v831 = vsub.f32 %v16, %v830
  %v832 = vand.u32 %v831, 4294901760
  %833 = vmatpush1.msra.mxu0 %v832
  %834 = vmatprep.subr.mxu0 0.0
  %v835 = vand.u32 %v17, 4294901760
  %v836 = vsub.f32 %v17, %v835
  %v837 = vand.u32 %v836, 4294901760
  %838 = vmatpush1.msra.mxu0 %v837
  %839 = vmatprep.subr.mxu0 0.0
  %v840 = vand.u32 %v18, 4294901760
  %v841 = vsub.f32 %v18, %v840
  %v842 = vand.u32 %v841, 4294901760
  %843 = vmatpush1.msra.mxu0 %v842
  %844 = vmatprep.subr.mxu0 0.0
  %v845 = vand.u32 %v19, 4294901760
  %v846 = vsub.f32 %v19, %v845
  %v847 = vand.u32 %v846, 4294901760
  %848 = vmatpush1.msra.mxu0 %v847
  %849 = vmatprep.subr.mxu0 0.0
  %v850 = vand.u32 %v20, 4294901760
  %v851 = vsub.f32 %v20, %v850
  %v852 = vand.u32 %v851, 4294901760
  %853 = vmatpush1.msra.mxu0 %v852
  %854 = vmatprep.subr.mxu0 0.0
  %v855 = vand.u32 %v21, 4294901760
  %v856 = vsub.f32 %v21, %v855
  %v857 = vand.u32 %v856, 4294901760
  %858 = vmatpush1.msra.mxu0 %v857
  %859 = vmatprep.subr.mxu0 0.0
  %v860 = vand.u32 %v22, 4294901760
  %v861 = vsub.f32 %v22, %v860
  %v862 = vand.u32 %v861, 4294901760
  %863 = vmatpush1.msra.mxu0 %v862
  %864 = vmatprep.subr.mxu0 0.0
  %v865 = vand.u32 %v23, 4294901760
  %v866 = vsub.f32 %v23, %v865
  %v867 = vand.u32 %v866, 4294901760
  %868 = vmatpush1.msra.mxu0 %v867
  %869 = vmatprep.subr.mxu0 0.0
  %v870 = vand.u32 %v24, 4294901760
  %v871 = vsub.f32 %v24, %v870
  %v872 = vand.u32 %v871, 4294901760
  %873 = vmatpush1.msra.mxu0 %v872
  %874 = vmatprep.subr.mxu0 0.0
  %875 = vmatpush1.msra.mxu0 0.0
  %876 = vmatprep.subr.mxu0 0.0
  %877 = vmatpush1.msra.mxu0 0.0
  %878 = vmatprep.subr.mxu0 0.0
  %879 = vmatpush1.msra.mxu0 0.0
  %880 = vmatprep.subr.mxu0 0.0
  %881 = vmatpush1.msra.mxu0 0.0
  %882 = vmatprep.subr.mxu0 0.0
  %883 = vmatpush1.msra.mxu0 0.0
  %884 = vmatprep.subr.mxu0 0.0
  %885 = vmatpush1.msra.mxu0 0.0
  %886 = vmatprep.subr.mxu0 0.0
  %887 = vmatpush1.msra.mxu0 0.0
  %888 = vmatprep.subr.mxu0 0.0
  %889 = vmatpush1.msra.mxu0 0.0
  %890 = vmatprep.subr.mxu0 0.0
  %891 = vmatpush1.msra.mxu0 0.0
  %892 = vmatprep.subr.mxu0 0.0
  %893 = vmatpush1.msra.mxu0 0.0
  %894 = vmatprep.subr.mxu0 0.0
  %895 = vmatpush1.msra.mxu0 0.0
  %896 = vmatprep.subr.mxu0 0.0
  %897 = vmatpush1.msra.mxu0 0.0
  %898 = vmatprep.subr.mxu0 0.0
  %899 = vmatpush1.msra.mxu0 0.0
  %900 = vmatprep.subr.mxu0 0.0
  %901 = vmatpush1.msra.mxu0 0.0
  %902 = vmatprep.subr.mxu0 0.0
  %903 = vmatpush1.msra.mxu0 0.0
  %904 = vmatprep.subr.mxu0 0.0
  %905 = vmatpush1.msra.mxu0 0.0
  %906 = vmatprep.subr.mxu0 0.0
  %907 = vmatpush1.msra.mxu0 0.0
  %908 = vmatprep.subr.mxu0 0.0
  %909 = vmatpush1.msra.mxu0 0.0
  %910 = vmatprep.subr.mxu0 0.0
  %911 = vmatpush1.msra.mxu0 0.0
  %912 = vmatprep.subr.mxu0 0.0
  %913 = vmatpush1.msra.mxu0 0.0
  %914 = vmatprep.mubr.f32.mxu0 0.0
  %v915 = vand.u32 %v39, 4294901760
  %916 = vmatmul.mubr.f32.gmra.mrb[0].mxu0 %v915
  %v917 = vpop.f32.mrb[0].mxu0
  %v918 = vadd.f32 %v723, %v917
  %v919 = vpop.f32.mrb[0].mxu0
  %920 = vmatprep.mubr.f32.mxu0 0.0
  %v921 = vand.u32 %v42, 4294901760
  %922 = vmatmul.mubr.f32.gmra.mrb[0].mxu0 %v921
  %v923 = vpop.f32.mrb[0].mxu0
  %v924 = vadd.f32 %v731, %v923
  %v925 = vpop.f32.mrb[0].mxu0
  %926 = vmatprep.mubr.f32.mxu0 0.0
  %v927 = vand.u32 %v45, 4294901760
  %928 = vmatmul.mubr.f32.gmra.mrb[0].mxu0 %v927
  %v929 = vpop.f32.mrb[0].mxu0
  %v930 = vadd.f32 %v739, %v929
  %v931 = vpop.f32.mrb[0].mxu0
  %932 = vmatprep.mubr.f32.mxu0 0.0
  %v933 = vand.u32 %v48, 4294901760
  %934 = vmatmul.mubr.f32.gmra.mrb[0].mxu0 %v933
  %v935 = vpop.f32.mrb[0].mxu0
  %v936 = vadd.f32 %v747, %v935
  %v937 = vpop.f32.mrb[0].mxu0
  %938 = vmatprep.mubr.f32.mxu0 0.0
  %v939 = vand.u32 %v51, 4294901760
  %940 = vmatmul.mubr.f32.gmra.mrb[0].mxu0 %v939
  %v941 = vpop.f32.mrb[0].mxu0
  %v942 = vadd.f32 %v755, %v941
  %v943 = vpop.f32.mrb[0].mxu0
  %944 = vmatprep.mubr.f32.mxu0 0.0
  %v945 = vand.u32 %v54, 4294901760
  %946 = vmatmul.mubr.f32.gmra.mrb[0].mxu0 %v945
  %v947 = vpop.f32.mrb[0].mxu0
  %v948 = vadd.f32 %v763, %v947
  %v949 = vpop.f32.mrb[0].mxu0
  %950 = vmatprep.mubr.f32.mxu0 0.0
  %v951 = vand.u32 %v57, 4294901760
  %952 = vmatmul.mubr.f32.gmra.mrb[0].mxu0 %v951
  %v953 = vpop.f32.mrb[0].mxu0
  %v954 = vadd.f32 %v771, %v953
  %v955 = vpop.f32.mrb[0].mxu0
  %956 = vmatprep.mubr.f32.mxu0 0.0
  %v957 = vand.u32 %v60, 4294901760
  %958 = vmatmul.mubr.f32.gmra.mrb[0].mxu0 %v957
  %v959 = vpop.f32.mrb[0].mxu0
  %v960 = vadd.f32 %v779, %v959
  %v961 = vpop.f32.mrb[0].mxu0
  %962 = vmatprep.mubr.f32.mxu0 0.0
  %v963 = vand.u32 %v63, 4294901760
  %964 = vmatmul.mubr.f32.gmra.mrb[0].mxu0 %v963
  %v965 = vpop.f32.mrb[0].mxu0
  %v966 = vadd.f32 %v787, %v965
  %v967 = vpop.f32.mrb[0].mxu0
  %968 = vmatprep.mubr.f32.mxu0 0.0
  %v969 = vand.u32 %v66, 4294901760
  %970 = vmatmul.mubr.f32.gmra.mrb[0].mxu0 %v969
  %v971 = vpop.f32.mrb[0].mxu0
  %v972 = vadd.f32 %v795, %v971
  %v973 = vpop.f32.mrb[0].mxu0
  %974 = vmatprep.mubr.f32.mxu0 0.0
  %v975 = vand.u32 %v69, 4294901760
  %976 = vmatmul.mubr.f32.gmra.mrb[0].mxu0 %v975
  %v977 = vpop.f32.mrb[0].mxu0
  %v978 = vadd.f32 %v803, %v977
  %v979 = vpop.f32.mrb[0].mxu0
  %980 = vmatprep.mubr.f32.mxu0 0.0
  %v981 = vand.u32 %v72, 4294901760
  %982 = vmatmul.mubr.f32.gmra.mrb[0].mxu0 %v981
  %v983 = vpop.f32.mrb[0].mxu0
  %v984 = vadd.f32 %v811, %v983
  %v985 = vpop.f32.mrb[0].mxu0
  %986 = vdwg.mxu0
  %987 = vmatprep.subr.mxu0 0.0
  %v988 = vand.u32 %v13, 4294901760
  %989 = vmatpush1.msra.mxu0 %v988
  %990 = vmatprep.subr.mxu0 0.0
  %v991 = vand.u32 %v14, 4294901760
  %992 = vmatpush1.msra.mxu0 %v991
  %993 = vmatprep.subr.mxu0 0.0
  %v994 = vand.u32 %v15, 4294901760
  %995 = vmatpush1.msra.mxu0 %v994
  %996 = vmatprep.subr.mxu0 0.0
  %v997 = vand.u32 %v16, 4294901760
  %998 = vmatpush1.msra.mxu0 %v997
  %999 = vmatprep.subr.mxu0 0.0
  %v1000 = vand.u32 %v17, 4294901760
  %1001 = vmatpush1.msra.mxu0 %v1000
  %1002 = vmatprep.subr.mxu0 0.0
  %v1003 = vand.u32 %v18, 4294901760
  %1004 = vmatpush1.msra.mxu0 %v1003
  %1005 = vmatprep.subr.mxu0 0.0
  %v1006 = vand.u32 %v19, 4294901760
  %1007 = vmatpush1.msra.mxu0 %v1006
  %1008 = vmatprep.subr.mxu0 0.0
  %v1009 = vand.u32 %v20, 4294901760
  %1010 = vmatpush1.msra.mxu0 %v1009
  %1011 = vmatprep.subr.mxu0 0.0
  %v1012 = vand.u32 %v21, 4294901760
  %1013 = vmatpush1.msra.mxu0 %v1012
  %1014 = vmatprep.subr.mxu0 0.0
  %v1015 = vand.u32 %v22, 4294901760
  %1016 = vmatpush1.msra.mxu0 %v1015
  %1017 = vmatprep.subr.mxu0 0.0
  %v1018 = vand.u32 %v23, 4294901760
  %1019 = vmatpush1.msra.mxu0 %v1018
  %1020 = vmatprep.subr.mxu0 0.0
  %v1021 = vand.u32 %v24, 4294901760
  %1022 = vmatpush1.msra.mxu0 %v1021
  %1023 = vmatprep.subr.mxu0 0.0
  %1024 = vmatpush1.msra.mxu0 0.0
  %1025 = vmatprep.subr.mxu0 0.0
  %1026 = vmatpush1.msra.mxu0 0.0
  %1027 = vmatprep.subr.mxu0 0.0
  %1028 = vmatpush1.msra.mxu0 0.0
  %1029 = vmatprep.subr.mxu0 0.0
  %1030 = vmatpush1.msra.mxu0 0.0
  %1031 = vmatprep.subr.mxu0 0.0
  %1032 = vmatpush1.msra.mxu0 0.0
  %1033 = vmatprep.subr.mxu0 0.0
  %1034 = vmatpush1.msra.mxu0 0.0
  %1035 = vmatprep.subr.mxu0 0.0
  %1036 = vmatpush1.msra.mxu0 0.0
  %1037 = vmatprep.subr.mxu0 0.0
  %1038 = vmatpush1.msra.mxu0 0.0
  %1039 = vmatprep.subr.mxu0 0.0
  %1040 = vmatpush1.msra.mxu0 0.0
  %1041 = vmatprep.subr.mxu0 0.0
  %1042 = vmatpush1.msra.mxu0 0.0
  %1043 = vmatprep.subr.mxu0 0.0
  %1044 = vmatpush1.msra.mxu0 0.0
  %1045 = vmatprep.subr.mxu0 0.0
  %1046 = vmatpush1.msra.mxu0 0.0
  %1047 = vmatprep.subr.mxu0 0.0
  %1048 = vmatpush1.msra.mxu0 0.0
  %1049 = vmatprep.subr.mxu0 0.0
  %1050 = vmatpush1.msra.mxu0 0.0
  %1051 = vmatprep.subr.mxu0 0.0
  %1052 = vmatpush1.msra.mxu0 0.0
  %1053 = vmatprep.subr.mxu0 0.0
  %1054 = vmatpush1.msra.mxu0 0.0
  %1055 = vmatprep.subr.mxu0 0.0
  %1056 = vmatpush1.msra.mxu0 0.0
  %1057 = vmatprep.subr.mxu0 0.0
  %1058 = vmatpush1.msra.mxu0 0.0
  %1059 = vmatprep.subr.mxu0 0.0
  %1060 = vmatpush1.msra.mxu0 0.0
  %1061 = vmatprep.subr.mxu0 0.0
  %1062 = vmatpush1.msra.mxu0 0.0
  %1063 = vmatprep.mubr.f32.mxu0 0.0
  %v1064 = vand.u32 %v39, 4294901760
  %1065 = vmatmul.mubr.f32.gmra.mrb[0].mxu0 %v1064
  %v1066 = vpop.f32.mrb[0].mxu0
  %v1067 = vadd.f32 %v918, %v1066
  %v1068 = vpop.f32.mrb[0].mxu0
  %1069 = vmatprep.mubr.f32.mxu0 0.0
  %v1070 = vand.u32 %v42, 4294901760
  %1071 = vmatmul.mubr.f32.gmra.mrb[0].mxu0 %v1070
  %v1072 = vpop.f32.mrb[0].mxu0
  %v1073 = vadd.f32 %v924, %v1072
  %v1074 = vpop.f32.mrb[0].mxu0
  %1075 = vmatprep.mubr.f32.mxu0 0.0
  %v1076 = vand.u32 %v45, 4294901760
  %1077 = vmatmul.mubr.f32.gmra.mrb[0].mxu0 %v1076
  %v1078 = vpop.f32.mrb[0].mxu0
  %v1079 = vadd.f32 %v930, %v1078
  %v1080 = vpop.f32.mrb[0].mxu0
  %1081 = vmatprep.mubr.f32.mxu0 0.0
  %v1082 = vand.u32 %v48, 4294901760
  %1083 = vmatmul.mubr.f32.gmra.mrb[0].mxu0 %v1082
  %v1084 = vpop.f32.mrb[0].mxu0
  %v1085 = vadd.f32 %v936, %v1084
  %v1086 = vpop.f32.mrb[0].mxu0
  %1087 = vmatprep.mubr.f32.mxu0 0.0
  %v1088 = vand.u32 %v51, 4294901760
  %1089 = vmatmul.mubr.f32.gmra.mrb[0].mxu0 %v1088
  %v1090 = vpop.f32.mrb[0].mxu0
  %v1091 = vadd.f32 %v942, %v1090
  %v1092 = vpop.f32.mrb[0].mxu0
  %1093 = vmatprep.mubr.f32.mxu0 0.0
  %v1094 = vand.u32 %v54, 4294901760
  %1095 = vmatmul.mubr.f32.gmra.mrb[0].mxu0 %v1094
  %v1096 = vpop.f32.mrb[0].mxu0
  %v1097 = vadd.f32 %v948, %v1096
  %v1098 = vpop.f32.mrb[0].mxu0
  %1099 = vmatprep.mubr.f32.mxu0 0.0
  %v1100 = vand.u32 %v57, 4294901760
  %1101 = vmatmul.mubr.f32.gmra.mrb[0].mxu0 %v1100
  %v1102 = vpop.f32.mrb[0].mxu0
  %v1103 = vadd.f32 %v954, %v1102
  %v1104 = vpop.f32.mrb[0].mxu0
  %1105 = vmatprep.mubr.f32.mxu0 0.0
  %v1106 = vand.u32 %v60, 4294901760
  %1107 = vmatmul.mubr.f32.gmra.mrb[0].mxu0 %v1106
  %v1108 = vpop.f32.mrb[0].mxu0
  %v1109 = vadd.f32 %v960, %v1108
  %v1110 = vpop.f32.mrb[0].mxu0
  %1111 = vmatprep.mubr.f32.mxu0 0.0
  %v1112 = vand.u32 %v63, 4294901760
  %1113 = vmatmul.mubr.f32.gmra.mrb[0].mxu0 %v1112
  %v1114 = vpop.f32.mrb[0].mxu0
  %v1115 = vadd.f32 %v966, %v1114
  %v1116 = vpop.f32.mrb[0].mxu0
  %1117 = vmatprep.mubr.f32.mxu0 0.0
  %v1118 = vand.u32 %v66, 4294901760
  %1119 = vmatmul.mubr.f32.gmra.mrb[0].mxu0 %v1118
  %v1120 = vpop.f32.mrb[0].mxu0
  %v1121 = vadd.f32 %v972, %v1120
  %v1122 = vpop.f32.mrb[0].mxu0
  %1123 = vmatprep.mubr.f32.mxu0 0.0
  %v1124 = vand.u32 %v69, 4294901760
  %1125 = vmatmul.mubr.f32.gmra.mrb[0].mxu0 %v1124
  %v1126 = vpop.f32.mrb[0].mxu0
  %v1127 = vadd.f32 %v978, %v1126
  %v1128 = vpop.f32.mrb[0].mxu0
  %1129 = vmatprep.mubr.f32.mxu0 0.0
  %v1130 = vand.u32 %v72, 4294901760
  %1131 = vmatmul.mubr.f32.gmra.mrb[0].mxu0 %v1130
  %v1132 = vpop.f32.mrb[0].mxu0
  %v1133 = vadd.f32 %v984, %v1132
  %v1134 = vpop.f32.mrb[0].mxu0
  %1135 = vdwg.mxu0
  %vm1136 = vcmask 457728
  %1137 = vst.msk [vmem:[%s3] sm:$0xff] %vm1136, %v1067
  %1138 = vst.msk [vmem:[%s3 + $0x8] sm:$0xff] %vm1136, %v1073
  %1139 = vst.msk [vmem:[%s3 + $0x10] sm:$0xff] %vm1136, %v1079
  %1140 = vst.msk [vmem:[%s3 + $0x18] sm:$0xff] %vm1136, %v1085
  %1141 = vst.msk [vmem:[%s3 + $0x20] sm:$0xff] %vm1136, %v1091
  %1142 = vst.msk [vmem:[%s3 + $0x28] sm:$0xff] %vm1136, %v1097
  %1143 = vst.msk [vmem:[%s3 + $0x30] sm:$0xff] %vm1136, %v1103
  %1144 = vst.msk [vmem:[%s3 + $0x38] sm:$0xff] %vm1136, %v1109
  %1145 = vst.msk [vmem:[%s3 + $0x40] sm:$0xff] %vm1136, %v1115
  %1146 = vst.msk [vmem:[%s3 + $0x48] sm:$0xff] %vm1136, %v1121
  %1147 = vst.msk [vmem:[%s3 + $0x50] sm:$0xff] %vm1136, %v1127
  %1148 = vst.msk [vmem:[%s3 + $0x58] sm:$0xff] %vm1136, %v1133
  %v1149 = vsub.f32 %v13, %v1067
  %v1150 = vsub.f32 %v14, %v1073
  %v1151 = vsub.f32 %v15, %v1079
  %v1152 = vsub.f32 %v16, %v1085
  %v1153 = vsub.f32 %v17, %v1091
  %v1154 = vsub.f32 %v18, %v1097
  %v1155 = vsub.f32 %v19, %v1103
  %v1156 = vsub.f32 %v20, %v1109
  %v1157 = vsub.f32 %v21, %v1115
  %v1158 = vsub.f32 %v22, %v1121
  %v1159 = vsub.f32 %v23, %v1127
  %v1160 = vsub.f32 %v24, %v1133
  %1161 = vst.msk [vmem:[%s2] sm:$0xff] %vm1136, %v1149
  %1162 = vst.msk [vmem:[%s2 + $0x8] sm:$0xff] %vm1136, %v1150
  %1163 = vst.msk [vmem:[%s2 + $0x10] sm:$0xff] %vm1136, %v1151
  %1164 = vst.msk [vmem:[%s2 + $0x18] sm:$0xff] %vm1136, %v1152
  %1165 = vst.msk [vmem:[%s2 + $0x20] sm:$0xff] %vm1136, %v1153
  %1166 = vst.msk [vmem:[%s2 + $0x28] sm:$0xff] %vm1136, %v1154
  %1167 = vst.msk [vmem:[%s2 + $0x30] sm:$0xff] %vm1136, %v1155
  %1168 = vst.msk [vmem:[%s2 + $0x38] sm:$0xff] %vm1136, %v1156
  %1169 = vst.msk [vmem:[%s2 + $0x40] sm:$0xff] %vm1136, %v1157
  %1170 = vst.msk [vmem:[%s2 + $0x48] sm:$0xff] %vm1136, %v1158
  %1171 = vst.msk [vmem:[%s2 + $0x50] sm:$0xff] %vm1136, %v1159
  %1172 = vst.msk [vmem:[%s2 + $0x58] sm:$0xff] %vm1136, %v1160
  // Predicated region
  $region10: #{tpu_custom_call.1} parent=0 // pred_check
    _
  $region11: #{tpu_custom_call.1} parent=0 // pred_check_branch
    %1174 = sbr.rel (0) target = $region13
  $region12: #{tpu_custom_call.1} parent=0 // pred_region
    _
  $region13: #{tpu_custom_call.1} parent=0 // pred_fallthru
    _
  // Predicated region
  $region14: #{tpu_custom_call.1} parent=0 // pred_check
    _
  $region15: #{tpu_custom_call.1} parent=0 // pred_check_branch
    %1176 = sbr.rel (0) target = $region17
  $region16: #{tpu_custom_call.1} parent=0 // pred_region
    _
  $region17: #{tpu_custom_call.1} parent=0 // pred_fallthru
    _
  // Predicated region
  $region18: #{tpu_custom_call.1} parent=0 // pred_check
    _
  $region19: #{tpu_custom_call.1} parent=0 // pred_check_branch
    %1178 = sbr.rel (0) target = $region21
  $region20: #{tpu_custom_call.1} parent=0 // pred_region
    _
  $region21: #{tpu_custom_call.1} parent=0 // pred_fallthru
    _
  // Predicated region
  $region22: #{tpu_custom_call.1} parent=0 // pred_check
    _
  $region23: #{tpu_custom_call.1} parent=0 // pred_check_branch
    %1180 = sbr.rel (0) target = $region25
  $region24: #{tpu_custom_call.1} parent=0 // pred_region
    _
  $region25: #{tpu_custom_call.1} parent=0 // pred_fallthru
    _

</llo_original>
